<compile_context>
chip_gen: v5e
topology: v5e:2x2
jax: 0.10.0
libtpu: 0.0.40
codegen_flags: <defaults>
</compile_context>

<pallas_src>
import jax
import jax.numpy as jnp
from jax import lax
from jax.experimental import pallas as pl
from jax.experimental.pallas import tpu as pltpu

BN_EPS = 1e-5
LANE = 128


def _round_up(n, m):
    return ((n + m - 1) // m) * m


def predictor_kernel(x_ref, w1_ref, w2_ref, vecs_ref, o_ref):
    """Fused fc1 -> BatchNorm1d(train) -> ReLU -> fc2. Whole problem in VMEM."""
    Hp = w1_ref.shape[1]          # padded hidden width (multiple of 128)
    Op = w2_ref.shape[1]          # padded output width (multiple of 128)
    inv_b = jnp.float32(1.0 / x_ref.shape[0])

    # One packed (4, P) f32 tile holds all per-feature vectors (single DMA).
    vecs = vecs_ref[...]
    b1 = vecs[0:1, :Hp]
    gamma = vecs[1:2, :Hp]
    beta = vecs[2:3, :Hp]
    b2 = vecs[3:4, :Op]

    # fc1 on the MXU: bf16 operands straight from HBM, f32 accumulation + bias.
    h = jnp.dot(x_ref[...], w1_ref[...],
                preferred_element_type=jnp.float32) + b1      # (B, Hp) f32

    # BatchNorm1d training mode: batch mean, biased variance, eps = 1e-5,
    # folded into a single scale/shift FMA.  All stat/elementwise math in f32
    # (v5e-safe).  No long-lived `centered` temporary.
    mean = jnp.sum(h, axis=0, keepdims=True) * inv_b          # (1, Hp)
    var = jnp.sum(jnp.square(h - mean), axis=0, keepdims=True) * inv_b
    scale = gamma * lax.rsqrt(var + BN_EPS)                   # EUP rsqrt (free slot)
    shift = beta - mean * scale
    h_act = jnp.maximum(h * scale + shift, 0.0)               # BN + ReLU

    # fc2 on the MXU (bf16 operands, f32 accumulation).
    y = jnp.dot(h_act.astype(jnp.bfloat16), w2_ref[...],
                preferred_element_type=jnp.float32) + b2
    o_ref[...] = y.astype(o_ref.dtype)                        # lane-dense (B, Op) store


def prepare_params(params):
    """One-time prep: pad feature dims to multiples of 128, cast weights to
    bf16, pack the per-feature vectors.  Zero padding is numerically inert."""
    D, H = params["w1"].shape
    O = params["w2"].shape[1]
    Dp, Hp, Op = (_round_up(d, LANE) for d in (D, H, O))
    P = max(Hp, Op)
    w1_p = jnp.pad(params["w1"].astype(jnp.float32),
                   ((0, Dp - D), (0, Hp - H))).astype(jnp.bfloat16)
    w2_p = jnp.pad(params["w2"].astype(jnp.float32),
                   ((0, Hp - H), (0, Op - O))).astype(jnp.bfloat16)
    vecs = jnp.stack([
        jnp.pad(params["b1"].astype(jnp.float32), (0, P - H)),
        jnp.pad(params["gamma"].astype(jnp.float32), (0, P - H)),
        jnp.pad(params["beta"].astype(jnp.float32), (0, P - H)),
        jnp.pad(params["b2"].astype(jnp.float32), (0, P - O)),
    ])                                                        # (4, P) packed f32
    return {"w1_p": w1_p, "w2_p": w2_p, "vecs": vecs}


@jax.jit
def predictor_forward(x, prepared):
    """x: (B, D).  Returns the padded, lane-dense (B, Op) f32 output; the valid
    logits are columns [:output_dim] (padded columns are exactly 0)."""
    w1_p, w2_p, vecs = prepared["w1_p"], prepared["w2_p"], prepared["vecs"]
    B, D = x.shape
    Dp, Hp = w1_p.shape
    Op = w2_p.shape[1]
    P = vecs.shape[1]

    # Only per-call prep left in the wrapper: pad + bf16 cast of x (one fused op).
    x_p = jnp.pad(x, ((0, 0), (0, Dp - D))).astype(jnp.bfloat16)

    flops = 2 * B * Dp * Hp + 2 * B * Hp * Op + 8 * B * Hp    # matmuls + BN/ReLU
    # bf16 inputs (2 B/elem), f32 packed vecs + f32 output (4 B/elem).
    bytes_accessed = 2 * (B * Dp + Dp * Hp + Hp * Op) + 4 * (4 * P + B * Op)

    # Everything is VMEM-resident (no grid); size the scoped limit explicitly
    # with headroom so the single-call formulation stays viable on v7x (64 MiB).
    vmem_limit = min(max(2 * bytes_accessed + (1 << 20), 4 << 20), 64 << 20)

    vmem = pl.BlockSpec(memory_space=pltpu.MemorySpace.VMEM)
    return pl.pallas_call(
        predictor_kernel,
        out_shape=jax.ShapeDtypeStruct((B, Op), jnp.float32),
        in_specs=[vmem, vmem, vmem, vmem],
        out_specs=vmem,
        cost_estimate=pl.CostEstimate(
            flops=flops, transcendentals=Hp, bytes_accessed=bytes_accessed
        ),
        compiler_params=pltpu.CompilerParams(vmem_limit_bytes=vmem_limit),
    )(x_p, w1_p, w2_p, vecs)


def init_predictor_params(key, input_dim, output_dim):
    """Mirror PyTorch nn.Linear defaults (U(-1/sqrt(fan_in), +)) and
    nn.BatchNorm1d defaults (gamma=1, beta=0). Weights stored as (in, out)."""
    hidden = input_dim // 2
    k1, k2, k3, k4 = jax.random.split(key, 4)
    bound1 = 1.0 / jnp.sqrt(jnp.float32(input_dim))
    bound2 = 1.0 / jnp.sqrt(jnp.float32(hidden))
    return {
        "w1": jax.random.uniform(k1, (input_dim, hidden), jnp.float32, -bound1, bound1),
        "b1": jax.random.uniform(k2, (hidden,), jnp.float32, -bound1, bound1),
        "gamma": jnp.ones((hidden,), jnp.float32),
        "beta": jnp.zeros((hidden,), jnp.float32),
        "w2": jax.random.uniform(k3, (hidden, output_dim), jnp.float32, -bound2, bound2),
        "b2": jax.random.uniform(k4, (output_dim,), jnp.float32, -bound2, bound2),
    }


def predictor_reference(x, params):
    """Pure-JAX f32 reference for the same forward pass (PyTorch semantics)."""
    h = x @ params["w1"] + params["b1"]
    mean = jnp.mean(h, axis=0, keepdims=True)
    var = jnp.mean((h - mean) ** 2, axis=0, keepdims=True)     # biased variance
    h = (h - mean) / jnp.sqrt(var + BN_EPS) * params["gamma"] + params["beta"]
    h = jnp.maximum(h, 0.0)
    return h @ params["w2"] + params["b2"]


if __name__ == "__main__":
    key = jax.random.PRNGKey(0)
    k_param, k_x = jax.random.split(key)

    batch = 8
    input_dim = 32     # -> hidden = 16
    output_dim = 8

    # BatchNorm1d training semantics need B > 1 (B == 1 => var = 0, ~316x gamma).
    assert batch > 1, "BatchNorm1d training-mode forward requires batch > 1"

    params = init_predictor_params(k_param, input_dim, output_dim)
    prepared = prepare_params(params)          # one-time pad + bf16 weight prep
    x = jax.random.normal(k_x, (batch, input_dim), jnp.float32)

    out_p = jax.block_until_ready(predictor_forward(x, prepared))
    assert out_p.shape == (batch, _round_up(output_dim, LANE))

    # Validation-only de-pad (outside the jitted hot path); padded cols are 0.
    out = out_p[:, :output_dim]
    ref = predictor_reference(x, params)

    # bf16 MXU operands (f32 accumulation) -> small deviation vs the pure-f32 reference.
    assert jnp.allclose(out, ref, atol=5e-2, rtol=5e-2), "mismatch vs JAX reference"
    assert bool(jnp.all(out_p[:, output_dim:] == 0.0)), "padding not inert"

    print("KERNEL_OK")
</pallas_src>

<mosaic_0001>
module attributes {stable_mosaic.version = 11 : i64} {
  func.func @predictor_kernel(%arg0: memref<8x128xbf16, #tpu.memory_space<vmem>>, %arg1: memref<128x128xbf16, #tpu.memory_space<vmem>>, %arg2: memref<128x128xbf16, #tpu.memory_space<vmem>>, %arg3: memref<4x128xf32, #tpu.memory_space<vmem>>, %arg4: memref<8x128xf32, #tpu.memory_space<vmem>>) attributes {dimension_semantics = [], scalar_prefetch = 0 : i64, scratch_operands = 0 : i64, tpu.core_type = #tpu.core_type<tc>} {
    %c0 = arith.constant 0 : index
    %c0_0 = arith.constant 0 : index
    %0 = vector.load %arg3[%c0, %c0_0] : memref<4x128xf32, #tpu.memory_space<vmem>>, vector<4x128xf32>
    %1 = vector.extract_strided_slice %0 {offsets = [0, 0], sizes = [1, 128], strides = [1, 1]} : vector<4x128xf32> to vector<1x128xf32>
    %2 = vector.extract_strided_slice %0 {offsets = [1, 0], sizes = [1, 128], strides = [1, 1]} : vector<4x128xf32> to vector<1x128xf32>
    %3 = vector.extract_strided_slice %0 {offsets = [2, 0], sizes = [1, 128], strides = [1, 1]} : vector<4x128xf32> to vector<1x128xf32>
    %4 = vector.extract_strided_slice %0 {offsets = [3, 0], sizes = [1, 128], strides = [1, 1]} : vector<4x128xf32> to vector<1x128xf32>
    %c0_1 = arith.constant 0 : index
    %c0_2 = arith.constant 0 : index
    %5 = vector.load %arg0[%c0_1, %c0_2] : memref<8x128xbf16, #tpu.memory_space<vmem>>, vector<8x128xbf16>
    %c0_3 = arith.constant 0 : index
    %c0_4 = arith.constant 0 : index
    %6 = vector.load %arg1[%c0_3, %c0_4] : memref<128x128xbf16, #tpu.memory_space<vmem>>, vector<128x128xbf16>
    %cst = arith.constant dense<0.000000e+00> : vector<8x128xf32>
    %7 = tpu.matmul %5, %6, %cst {dimension_numbers = #tpu.dot_dimension_numbers<[1], [0], [0], [1], [0, 0, 1, 1], [], []>} : vector<8x128xbf16>, vector<128x128xbf16>, vector<8x128xf32> -> vector<8x128xf32>
    %8 = vector.broadcast %1 : vector<1x128xf32> to vector<8x128xf32>
    %9 = arith.addf %7, %8 : vector<8x128xf32>
    %cst_5 = arith.constant dense<0.000000e+00> : vector<128xf32>
    %10 = vector.multi_reduction <add>, %9, %cst_5 [0] : vector<8x128xf32> to vector<128xf32>
    %11 = vector.shape_cast %10 : vector<128xf32> to vector<1x128xf32>
    %cst_6 = arith.constant 1.250000e-01 : f32
    %12 = vector.broadcast %cst_6 : f32 to vector<1x128xf32>
    %13 = arith.mulf %11, %12 : vector<1x128xf32>
    %14 = vector.broadcast %13 : vector<1x128xf32> to vector<8x128xf32>
    %15 = arith.subf %9, %14 : vector<8x128xf32>
    %16 = arith.mulf %15, %15 : vector<8x128xf32>
    %cst_7 = arith.constant dense<0.000000e+00> : vector<128xf32>
    %17 = vector.multi_reduction <add>, %16, %cst_7 [0] : vector<8x128xf32> to vector<128xf32>
    %18 = vector.shape_cast %17 : vector<128xf32> to vector<1x128xf32>
    %cst_8 = arith.constant 1.250000e-01 : f32
    %19 = vector.broadcast %cst_8 : f32 to vector<1x128xf32>
    %20 = arith.mulf %18, %19 : vector<1x128xf32>
    %cst_9 = arith.constant 9.99999974E-6 : f32
    %21 = vector.broadcast %cst_9 : f32 to vector<1x128xf32>
    %22 = arith.addf %20, %21 : vector<1x128xf32>
    %23 = math.rsqrt %22 : vector<1x128xf32>
    %24 = arith.mulf %2, %23 : vector<1x128xf32>
    %25 = arith.mulf %13, %24 : vector<1x128xf32>
    %26 = arith.subf %3, %25 : vector<1x128xf32>
    %27 = vector.broadcast %24 : vector<1x128xf32> to vector<8x128xf32>
    %28 = arith.mulf %9, %27 : vector<8x128xf32>
    %29 = vector.broadcast %26 : vector<1x128xf32> to vector<8x128xf32>
    %30 = arith.addf %28, %29 : vector<8x128xf32>
    %cst_10 = arith.constant 0.000000e+00 : f32
    %31 = vector.broadcast %cst_10 : f32 to vector<8x128xf32>
    %32 = arith.maximumf %30, %31 : vector<8x128xf32>
    %33 = arith.truncf %32 : vector<8x128xf32> to vector<8x128xbf16>
    %c0_11 = arith.constant 0 : index
    %c0_12 = arith.constant 0 : index
    %34 = vector.load %arg2[%c0_11, %c0_12] : memref<128x128xbf16, #tpu.memory_space<vmem>>, vector<128x128xbf16>
    %cst_13 = arith.constant dense<0.000000e+00> : vector<8x128xf32>
    %35 = tpu.matmul %33, %34, %cst_13 {dimension_numbers = #tpu.dot_dimension_numbers<[1], [0], [0], [1], [0, 0, 1, 1], [], []>} : vector<8x128xbf16>, vector<128x128xbf16>, vector<8x128xf32> -> vector<8x128xf32>
    %36 = vector.broadcast %4 : vector<1x128xf32> to vector<8x128xf32>
    %37 = arith.addf %35, %36 : vector<8x128xf32>
    %c0_14 = arith.constant 0 : index
    %c0_15 = arith.constant 0 : index
    %38 = vector.load %arg4[%c0_14, %c0_15] : memref<8x128xf32, #tpu.memory_space<vmem>>, vector<8x128xf32>
    tpu.vector_store %arg4[%c0_14, %c0_15], %37 {strides = array<i32>} : memref<8x128xf32, #tpu.memory_space<vmem>>, vector<8x128xf32>,
    return
  }
}

</mosaic_0001>

<llo_original>
// kernel: predictor_forward.1
$region0: #{predictor_forward.1}
  #allocation0 [shape = 'u32[]', space=smem, size = 0x4, offset = 0x4, fixed_abs, tag = 'smem constant byte address 0x4 - core index']
  #allocation1 [shape = 'u32[72,128]{1,0:T(1,128)}', space=vmem, size = 0x9000, scoped, tag = 'internal scratch']
  %s0 = inlined_call_operand.vmem [shape: bf16[8,128], index: 0, kind: input, shape index: {}]
  %s1 = inlined_call_operand.hbm [shape: bf16[128,128], index: 1, kind: input, shape index: {}]
  %s2 = inlined_call_operand.hbm [shape: bf16[128,128], index: 2, kind: input, shape index: {}]
  %s3 = inlined_call_operand.vmem [shape: f32[4,128], index: 3, kind: input, shape index: {}]
  %s4 = inlined_call_operand.hbm [shape: f32[8,128], index: 4, kind: output, shape index: {}]
  %s5 = sld [smem:[#allocation0]]
  $region34: #{predictor_forward.1} parent=0
    _
  %s7 = ssub.s32 1, %s5
  %s8 = scalar_select 0, %s7, %s5
  $region1: #{predictor_forward.1} parent=0
    #allocation2 [shape = 'u8[32768]{0}', space=vmem, size = 0x8000, scoped, tag = 'input window, operand 1, single buffered']
    #allocation3 [shape = 's32[1]{0}', space=sflag, size = 0x4, scoped, tag = 'scoped memory for predictor_forward.1']
    #allocation4 [shape = 's32[1]{0}', space=sflag, size = 0x4, scoped, tag = 'scoped memory for predictor_forward.1']
    #allocation5 [shape = 'u8[32768]{0}', space=vmem, size = 0x8000, scoped, tag = 'input window, operand 2, single buffered']
    #allocation6 [shape = 's32[1]{0}', space=sflag, size = 0x4, scoped, tag = 'scoped memory for predictor_forward.1']
    #allocation7 [shape = 'u8[4096]{0}', space=vmem, size = 0x1000, scoped, tag = 'output window, operand 0, single buffered']
    %9 = vsyncpa [#allocation3], 0
    %10 = vsyncpa [#allocation6], 0
    %11 = vsyncpa [#allocation4], 0
    // Predicated region
    $region2: #{predictor_forward.1} parent=1 // pred_check
      _
    $region3: #{predictor_forward.1} parent=1 // pred_check_branch
      %13 = sbr.rel (0) target = $region5
    $region4: #{predictor_forward.1} parent=1 // pred_region
      _
    $region5: #{predictor_forward.1} parent=1 // pred_fallthru
      _
    // Predicated region
    $region6: #{predictor_forward.1} parent=1 // pred_check
      _
    $region7: #{predictor_forward.1} parent=1 // pred_check_branch
      %15 = sbr.rel (0) target = $region9
    $region8: #{predictor_forward.1} parent=1 // pred_region
      %17 = vsyncadd [#allocation3], 0
      %s18 = sshll.u32 %s1, 4
      %s19 = int_to_ptr.hbm [resolvable:$true] %s18
      %s20 = sshll.u32 [#allocation2], 4
      %s21 = int_to_ptr.vmem [resolvable:$true] %s20
      %26 = dma.hbm_to_vmem [thread:$0]  %s19, 1024, %s21, [#allocation3], 64, 64, 4
    $region9: #{predictor_forward.1} parent=1 // pred_fallthru
      _
    // Predicated region
    $region10: #{predictor_forward.1} parent=1 // pred_check
      _
    $region11: #{predictor_forward.1} parent=1 // pred_check_branch
      %28 = sbr.rel (0) target = $region13
    $region12: #{predictor_forward.1} parent=1 // pred_region
      %30 = vsyncadd [#allocation6], 0
      %s31 = sshll.u32 %s2, 4
      %s32 = int_to_ptr.hbm [resolvable:$true] %s31
      %s33 = sshll.u32 [#allocation5], 4
      %s34 = int_to_ptr.vmem [resolvable:$true] %s33
      %39 = dma.hbm_to_vmem [thread:$0]  %s32, 1024, %s34, [#allocation6], 64, 64, 4
    $region13: #{predictor_forward.1} parent=1 // pred_fallthru
      _
    // Predicated region
    $region14: #{predictor_forward.1} parent=1 // pred_check
      _
    $region15: #{predictor_forward.1} parent=1 // pred_check_branch
      %41 = sbr.rel (0) target = $region17
    $region16: #{predictor_forward.1} parent=1 // pred_region
      _
    $region17: #{predictor_forward.1} parent=1 // pred_fallthru
      _
    // Predicated region
    $region18: #{predictor_forward.1} parent=1 // pred_check
      _
    $region19: #{predictor_forward.1} parent=1 // pred_check_branch
      %43 = sbr.rel (0) target = $region21
    $region20: #{predictor_forward.1} parent=1 // pred_region
      %45 = dma.done [#allocation3], 1024
    $region21: #{predictor_forward.1} parent=1 // pred_fallthru
      _
    // Predicated region
    $region22: #{predictor_forward.1} parent=1 // pred_check
      _
    $region23: #{predictor_forward.1} parent=1 // pred_check_branch
      %47 = sbr.rel (0) target = $region25
    $region24: #{predictor_forward.1} parent=1 // pred_region
      %49 = dma.done [#allocation6], 1024
    $region25: #{predictor_forward.1} parent=1 // pred_fallthru
      _
    %v50 = vld [vmem:[%s3] sm:$0xf]
    %v51 = vld [vmem:[%s0] sm:$0xf]
    %v52 = vld [vmem:[#allocation2] sm:$0xf]
    %v53 = vld [vmem:[#allocation2 + $0x4] sm:$0xf]
    %v54 = vld [vmem:[#allocation2 + $0x8] sm:$0xf]
    %v55 = vld [vmem:[#allocation2 + $0xc] sm:$0xf]
    %v56 = vld [vmem:[#allocation2 + $0x10] sm:$0xf]
    %v57 = vld [vmem:[#allocation2 + $0x14] sm:$0xf]
    %v58 = vld [vmem:[#allocation2 + $0x18] sm:$0xf]
    %v59 = vld [vmem:[#allocation2 + $0x1c] sm:$0xf]
    %v60 = vld [vmem:[#allocation2 + $0x20] sm:$0xf]
    %v61 = vld [vmem:[#allocation2 + $0x24] sm:$0xf]
    %v62 = vld [vmem:[#allocation2 + $0x28] sm:$0xf]
    %v63 = vld [vmem:[#allocation2 + $0x2c] sm:$0xf]
    %v64 = vld [vmem:[#allocation2 + $0x30] sm:$0xf]
    %v65 = vld [vmem:[#allocation2 + $0x34] sm:$0xf]
    %v66 = vld [vmem:[#allocation2 + $0x38] sm:$0xf]
    %v67 = vld [vmem:[#allocation2 + $0x3c] sm:$0xf]
    %v68 = vperm.slane %v50, 0
    %v85 = vunpack.c.l.b16 %v52
    %v86 = vunpack.c.l.b16 %v53
    %v87 = vunpack.c.l.b16 %v54
    %v88 = vunpack.c.l.b16 %v55
    %v89 = vunpack.c.l.b16 %v56
    %v90 = vunpack.c.l.b16 %v57
    %v91 = vunpack.c.l.b16 %v58
    %v92 = vunpack.c.l.b16 %v59
    %v93 = vunpack.c.l.b16 %v60
    %v94 = vunpack.c.l.b16 %v61
    %v95 = vunpack.c.l.b16 %v62
    %v96 = vunpack.c.l.b16 %v63
    %v97 = vunpack.c.l.b16 %v64
    %v98 = vunpack.c.l.b16 %v65
    %v99 = vunpack.c.l.b16 %v66
    %v100 = vunpack.c.l.b16 %v67
    %v101 = vpack.c.b16 %v86, %v85
    %v102 = vpack.c.b16 %v88, %v87
    %v103 = vpack.c.b16 %v90, %v89
    %v104 = vpack.c.b16 %v92, %v91
    %v105 = vpack.c.b16 %v94, %v93
    %v106 = vpack.c.b16 %v96, %v95
    %v107 = vpack.c.b16 %v98, %v97
    %v108 = vpack.c.b16 %v100, %v99
    %117 = vmatpush.bf16.msra.mxu0 %v108
    %118 = vmatpush.bf16.msra.mxu0 %v107
    %119 = vmatpush.bf16.msra.mxu0 %v106
    %120 = vmatpush.bf16.msra.mxu0 %v105
    %121 = vmatpush.bf16.msra.mxu0 %v104
    %122 = vmatpush.bf16.msra.mxu0 %v103
    %123 = vmatpush.bf16.msra.mxu0 %v102
    %124 = vmatpush.bf16.msra.mxu0 %v101
    %125 = vmatmul.bf16.gmra.mxu0 %v51
    %v126 = vpop.f32.mrf.mxu0
    %v127 = vadd.f32 %v68, %v126
    %v128 = vpop.f32.mrf.mxu0
    %129 = vdwg.mxu0
    %v130 = vrot.slane %v127, 4
    %v131 = vadd.f32 %v127, %v130
    %v132 = vrot.slane %v131, 2
    %v133 = vadd.f32 %v131, %v132
    %v134 = vrot.slane %v133, 1
    %v135 = vadd.f32 %v133, %v134
    %v136 = vmul.f32 %v135, 0.125
    %v137 = vsub.f32 %v127, %v136
    %v138 = vmul.f32 %v137, %v137
    %v139 = vrot.slane %v138, 4
    %v140 = vadd.f32 %v138, %v139
    %v141 = vrot.slane %v140, 2
    %v142 = vadd.f32 %v140, %v141
    %v143 = vrot.slane %v142, 1
    %v144 = vadd.f32 %v142, %v143
    %v145 = vmul.f32 %v144, 0.125
    %v146 = vadd.f32 %v145, 1e-05
    %v147 = vrsqrt.pop %v146
    %v148 = vmul.f32 %v147, %v146
    %v149 = vmul.f32 %v148, %v147
    %v150 = vmul.f32 0.5, %v149
    %v151 = vsub.f32 1.5, %v150
    %v152 = vmul.f32 %v147, %v151
    %vm153 = vweird.f32 %v146
    %vm154 = vweird.f32 %v147
    %vm155 = vmor %vm153, %vm154
    %v156 = vsel %vm155, %v147, %v152
    %v157 = vmul.f32 %v50, %v156
    %v158 = vmul.f32 %v136, %v157
    %v160 = vrot.slane %v158, 7
    %v162 = vsub.f32 %v50, %v160
    %v163 = vperm.slane %v157, 1
    %v164 = vmul.f32 %v127, %v163
    %v165 = vperm.slane %v162, 2
    %v166 = vadd.f32 %v164, %v165
    %v167 = vmax.f32 %v166, 0.0
    %v168 = vpack.c.bf16 %v167, %v167
    %v169 = vld [vmem:[#allocation5] sm:$0xf]
    %v170 = vld [vmem:[#allocation5 + $0x4] sm:$0xf]
    %v171 = vld [vmem:[#allocation5 + $0x8] sm:$0xf]
    %v172 = vld [vmem:[#allocation5 + $0xc] sm:$0xf]
    %v173 = vld [vmem:[#allocation5 + $0x10] sm:$0xf]
    %v174 = vld [vmem:[#allocation5 + $0x14] sm:$0xf]
    %v175 = vld [vmem:[#allocation5 + $0x18] sm:$0xf]
    %v176 = vld [vmem:[#allocation5 + $0x1c] sm:$0xf]
    %v177 = vld [vmem:[#allocation5 + $0x20] sm:$0xf]
    %v178 = vld [vmem:[#allocation5 + $0x24] sm:$0xf]
    %v179 = vld [vmem:[#allocation5 + $0x28] sm:$0xf]
    %v180 = vld [vmem:[#allocation5 + $0x2c] sm:$0xf]
    %v181 = vld [vmem:[#allocation5 + $0x30] sm:$0xf]
    %v182 = vld [vmem:[#allocation5 + $0x34] sm:$0xf]
    %v183 = vld [vmem:[#allocation5 + $0x38] sm:$0xf]
    %v184 = vld [vmem:[#allocation5 + $0x3c] sm:$0xf]
    %v185 = vperm.slane %v50, 3
    %v202 = vunpack.c.l.b16 %v169
    %v203 = vunpack.c.l.b16 %v170
    %v204 = vunpack.c.l.b16 %v171
    %v205 = vunpack.c.l.b16 %v172
    %v206 = vunpack.c.l.b16 %v173
    %v207 = vunpack.c.l.b16 %v174
    %v208 = vunpack.c.l.b16 %v175
    %v209 = vunpack.c.l.b16 %v176
    %v210 = vunpack.c.l.b16 %v177
    %v211 = vunpack.c.l.b16 %v178
    %v212 = vunpack.c.l.b16 %v179
    %v213 = vunpack.c.l.b16 %v180
    %v214 = vunpack.c.l.b16 %v181
    %v215 = vunpack.c.l.b16 %v182
    %v216 = vunpack.c.l.b16 %v183
    %v217 = vunpack.c.l.b16 %v184
    %v218 = vpack.c.b16 %v203, %v202
    %v219 = vpack.c.b16 %v205, %v204
    %v220 = vpack.c.b16 %v207, %v206
    %v221 = vpack.c.b16 %v209, %v208
    %v222 = vpack.c.b16 %v211, %v210
    %v223 = vpack.c.b16 %v213, %v212
    %v224 = vpack.c.b16 %v215, %v214
    %v225 = vpack.c.b16 %v217, %v216
    %234 = vmatpush.bf16.msra.mxu0 %v225
    %235 = vmatpush.bf16.msra.mxu0 %v224
    %236 = vmatpush.bf16.msra.mxu0 %v223
    %237 = vmatpush.bf16.msra.mxu0 %v222
    %238 = vmatpush.bf16.msra.mxu0 %v221
    %239 = vmatpush.bf16.msra.mxu0 %v220
    %240 = vmatpush.bf16.msra.mxu0 %v219
    %241 = vmatpush.bf16.msra.mxu0 %v218
    %242 = vmatmul.bf16.gmra.mxu0 %v168
    %v243 = vpop.f32.mrf.mxu0
    %v244 = vadd.f32 %v185, %v243
    %v245 = vpop.f32.mrf.mxu0
    %246 = vdwg.mxu0
    %247 = vst [vmem:[#allocation7] sm:$0xff] %v244
    // Predicated region
    $region26: #{predictor_forward.1} parent=1 // pred_check
      _
    $region27: #{predictor_forward.1} parent=1 // pred_check_branch
      %249 = sbr.rel (0) target = $region29
    $region28: #{predictor_forward.1} parent=1 // pred_region
      %251 = vsyncadd [#allocation4], 0
      %s253 = sshll.u32 [#allocation7], 4
      %s254 = int_to_ptr.vmem [resolvable:$true] %s253
      %s255 = sshll.u32 %s4, 4
      %s256 = int_to_ptr.hbm [resolvable:$true] %s255
      %258 = dma.vmem_to_hbm [thread:$0]  %s254, 128, %s256, [#allocation4]
    $region29: #{predictor_forward.1} parent=1 // pred_fallthru
      _
    // Predicated region
    $region30: #{predictor_forward.1} parent=1 // pred_check
      _
    $region31: #{predictor_forward.1} parent=1 // pred_check_branch
      %260 = sbr.rel (0) target = $region33
    $region32: #{predictor_forward.1} parent=1 // pred_region
      %262 = dma.done [#allocation4], 128
    $region33: #{predictor_forward.1} parent=1 // pred_fallthru
      _
    %263 = vsyncpa [#allocation3], 1
    %264 = vsyncpa [#allocation6], 1
    %265 = vsyncpa [#allocation4], 1

</llo_original>
